<compile_context>
chip_gen: v7x
topology: tpu7x:2x2x1
jax: 0.10.0
libtpu: 0.0.40
codegen_flags: <defaults>
</compile_context>

<pallas_src>
import functools

import jax
import jax.numpy as jnp
from jax.experimental import pallas as pl
from jax.experimental.pallas import tpu as pltpu


def _round_up(x, m):
    return ((x + m - 1) // m) * m


def _choose_tiles(K, N, w_dtype):
    """Pick (tk, tn) from the (static) layer dims.  B-independent, so done once."""
    tk_cap = 2048 if w_dtype == jnp.bfloat16 else 1024
    tn_cap = 512
    # Full-K single step when it fits (no K padding / masking needed at all).
    tk = K if K <= tk_cap else tk_cap
    np128 = _round_up(max(N, 1), 128)
    tn = min(tn_cap, np128)
    # v7x megacore: keep >= 2 N-tiles (when N allows) so the "parallel" N axis
    # can be sharded across both TensorCores even when B gives one M-tile.
    if np128 >= 256 and tn >= np128:
        tn = _round_up(np128 // 2, 128)
    return tk, tn


def _linear_kernel(x_ref, w_ref, b_ref, o_ref, *, k_steps, k_rem):
    # x_ref: (tm, tk) f32   w_ref: (tk, tn) f32/bf16
    # b_ref: (1, tn)  f32   o_ref: (tm, tn) f32 (resident across the k axis)
    k = pl.program_id(2)

    x = x_ref[...]
    if k_rem:
        # Last k-block reads past K (unspecified bits); zero that tail so it
        # can't poison the sum.  Identity on all earlier (in-bounds) steps.
        col = jax.lax.broadcasted_iota(jnp.int32, x.shape, 1)
        lim = jnp.where(k == k_steps - 1, k_rem, x.shape[1])
        x = jnp.where(col < lim, x, jnp.zeros_like(x))

    # bf16 weight streaming: cast the LHS tile in-kernel (VPU) so the MXU runs
    # its native bf16 path; accumulation stays f32 either way.
    x = x.astype(w_ref.dtype)
    part = jnp.dot(x, w_ref[...], preferred_element_type=jnp.float32)

    if k_steps == 1:
        # Common case for this model (K <= tk): no accumulator at all.
        o_ref[...] = (part + b_ref[...]).astype(o_ref.dtype)
    else:
        # f32 output block is resident across k: accumulate directly into it
        # (no zero-init pass, no scratch, no final copy).
        @pl.when(k == 0)
        def _():
            o_ref[...] = part.astype(o_ref.dtype)

        @pl.when(k > 0)
        def _():
            o_ref[...] += part.astype(o_ref.dtype)

        @pl.when(k == k_steps - 1)
        def _():
            o_ref[...] += b_ref[...].astype(o_ref.dtype)


def pallas_linear(x_flat, w_padded, b_padded, K, N, tk, tn):
    """y = x_flat @ W + b with pre-padded W (Kp, Np) and b (1, Np)."""
    B = x_flat.shape[0]
    assert x_flat.shape[1] == K
    assert x_flat.dtype == jnp.float32  # direct-accumulate epilogue assumes f32 out
    Kp, Np = w_padded.shape
    assert Kp % tk == 0 and Np % tn == 0 and b_padded.shape == (1, Np)

    tm = 128 if B > 128 else _round_up(max(B, 1), 8)
    k_steps = Kp // tk
    k_rem = K % tk  # nonzero only when K > tk (multi-step) and unaligned

    grid = (pl.cdiv(B, tm), Np // tn, k_steps)

    # VMEM budget from the actual tiles (double-buffered inputs/outputs + the
    # f32 x tile), with 2x margin; capped at 40 MiB so it fits v7x's 64 MiB
    # physical VMEM and stays modest on v5e/v6e.
    wbytes = jnp.dtype(w_padded.dtype).itemsize
    vmem_bytes = 2 * (tm * tk * 4 + tk * tn * wbytes + tn * 4 + tm * tn * 4)
    vmem_bytes = min(max(2 * vmem_bytes, 4 << 20), 40 << 20)

    kernel = functools.partial(_linear_kernel, k_steps=k_steps, k_rem=k_rem)

    out = pl.pallas_call(
        kernel,
        out_shape=jax.ShapeDtypeStruct((B, Np), jnp.float32),
        grid_spec=pltpu.PrefetchScalarGridSpec(
            num_scalar_prefetch=0,
            grid=grid,
            in_specs=[
                pl.BlockSpec((tm, tk), lambda i, j, k: (i, k)),   # x
                pl.BlockSpec((tk, tn), lambda i, j, k: (k, j)),   # W (padded)
                pl.BlockSpec((1, tn), lambda i, j, k: (0, j)),    # bias (padded)
            ],
            out_specs=pl.BlockSpec((tm, tn), lambda i, j, k: (i, j)),
        ),
        compiler_params=pltpu.CompilerParams(
            dimension_semantics=("parallel", "parallel", "arbitrary"),
            vmem_limit_bytes=vmem_bytes,
        ),
    )(x_flat, w_padded, b_padded)

    return out if Np == N else out[:, :N]


class MockProfileModelPallas:
    """JAX/Pallas port of MockProfileModel (profile-output mock model)."""

    def __init__(self, A, L, n_tasks=1, key=None, weight_dtype=jnp.float32):
        self.A = A
        self.L = L
        self.n_tasks = n_tasks
        in_features = A * L
        out_features = L * n_tasks
        if key is None:
            key = jax.random.PRNGKey(0)
        kw, kb = jax.random.split(key)
        # torch.nn.Linear default init: U(-1/sqrt(fan_in), +1/sqrt(fan_in)).
        bound = 1.0 / (in_features ** 0.5)
        # Stored transposed (in, out): kernel computes x @ W_t + b == torch's
        # y = x @ W^T + b.
        self.weight_t = jax.random.uniform(
            kw, (in_features, out_features), jnp.float32, -bound, bound)
        self.bias = jax.random.uniform(
            kb, (out_features,), jnp.float32, -bound, bound)

        # --- one-time kernel-side weight prep (no per-call HBM copies) ---
        tk, tn = _choose_tiles(in_features, out_features, weight_dtype)
        Kp = _round_up(in_features, tk)
        Np = _round_up(out_features, tn)
        wp = jnp.zeros((Kp, Np), weight_dtype)
        wp = wp.at[:in_features, :out_features].set(
            self.weight_t.astype(weight_dtype))
        bp = jnp.zeros((1, Np), jnp.float32)
        bp = bp.at[0, :out_features].set(self.bias)
        self._wp, self._bp = wp, bp
        self._tk, self._tn = tk, tn
        self._K, self._N = in_features, out_features

    def __call__(self, x):
        # x: (B, A, L) -> flatten(start_dim=1) -> (B, A*L)
        B = x.shape[0]
        x_flat = x.reshape(B, self._K).astype(jnp.float32)
        out = pallas_linear(x_flat, self._wp, self._bp,
                            self._K, self._N, self._tk, self._tn)
        if self.n_tasks > 1:
            return out.reshape(-1, self.n_tasks, self.L)
        return out.reshape(-1, self.L)


if __name__ == "__main__":
    key = jax.random.PRNGKey(0)
    kx, kp1, kp2, kp3, kx2 = jax.random.split(key, 5)

    A, L, batch = 4, 8, 2
    x = jax.random.normal(kx, (batch, A, L), dtype=jnp.float32)

    # n_tasks > 1  ->  (B, n_tasks, L)
    n_tasks = 2
    model_multi = MockProfileModelPallas(A, L, n_tasks=n_tasks, key=kp1)
    y_multi = jax.block_until_ready(model_multi(x))
    ref_multi = (x.reshape(batch, -1) @ model_multi.weight_t
                 + model_multi.bias).reshape(batch, n_tasks, L)
    assert y_multi.shape == (batch, n_tasks, L)
    assert jnp.allclose(y_multi, ref_multi, rtol=1e-5, atol=1e-5)

    # n_tasks == 1  ->  (B, L)
    model_single = MockProfileModelPallas(A, L, n_tasks=1, key=kp2)
    y_single = jax.block_until_ready(model_single(x))
    ref_single = (x.reshape(batch, -1) @ model_single.weight_t
                  + model_single.bias).reshape(batch, L)
    assert y_single.shape == (batch, L)
    assert jnp.allclose(y_single, ref_single, rtol=1e-5, atol=1e-5)

    # Larger K: exercises the multi-k-step accumulate + K-tail mask path
    # (K = 1536 > tk cap 1024 -> 2 k-steps, remainder 512).
    A2, L2, batch2 = 48, 32, 4
    x2 = jax.random.normal(kx2, (batch2, A2, L2), dtype=jnp.float32)
    model_big = MockProfileModelPallas(A2, L2, n_tasks=1, key=kp3)
    y_big = jax.block_until_ready(model_big(x2))
    ref_big = (x2.reshape(batch2, -1) @ model_big.weight_t
               + model_big.bias).reshape(batch2, L2)
    assert y_big.shape == (batch2, L2)
    assert jnp.allclose(y_big, ref_big, rtol=2e-2, atol=2e-2)

    # bf16 weight-streaming path (v6e/v7x bandwidth optimization), f32 accumulate.
    model_bf16 = MockProfileModelPallas(A, L, n_tasks=n_tasks, key=kp1,
                                        weight_dtype=jnp.bfloat16)
    y_bf16 = jax.block_until_ready(model_bf16(x))
    assert y_bf16.shape == (batch, n_tasks, L)
    assert jnp.allclose(y_bf16, ref_multi, rtol=2e-2, atol=2e-2)

    print("KERNEL_OK")
</pallas_src>

<mosaic_0001>
module attributes {stable_mosaic.version = 11 : i64} {
  func.func @_linear_kernel(%arg0: i32, %arg1: i32, %arg2: i32, %arg3: memref<8x32xf32, #tpu.memory_space<vmem>>, %arg4: memref<32x128xf32, #tpu.memory_space<vmem>>, %arg5: memref<1x128xf32, #tpu.memory_space<vmem>>, %arg6: memref<8x128xf32, #tpu.memory_space<vmem>>) attributes {dimension_semantics = [#tpu.dimension_semantics<parallel>, #tpu.dimension_semantics<parallel>, #tpu.dimension_semantics<arbitrary>], iteration_bounds = array<i64: 1, 1, 1>, scalar_prefetch = 0 : i64, scratch_operands = 0 : i64, tpu.core_type = #tpu.core_type<tc>, window_params = [{transform_indices = @transform_0, window_bounds = array<i64: 8, 32>}, {transform_indices = @transform_1, window_bounds = array<i64: 32, 128>}, {transform_indices = @transform_2, window_bounds = array<i64: 1, 128>}, {transform_indices = @transform_3, window_bounds = array<i64: 8, 128>}]} {
    %c0 = arith.constant 0 : index
    %c0_0 = arith.constant 0 : index
    %0 = vector.load %arg3[%c0, %c0_0] : memref<8x32xf32, #tpu.memory_space<vmem>>, vector<8x32xf32>
    %c0_1 = arith.constant 0 : index
    %c0_2 = arith.constant 0 : index
    %1 = vector.load %arg4[%c0_1, %c0_2] : memref<32x128xf32, #tpu.memory_space<vmem>>, vector<32x128xf32>
    %cst = arith.constant dense<0.000000e+00> : vector<8x128xf32>
    %2 = tpu.matmul %0, %1, %cst {dimension_numbers = #tpu.dot_dimension_numbers<[1], [0], [0], [1], [0, 0, 1, 1], [], []>} : vector<8x32xf32>, vector<32x128xf32>, vector<8x128xf32> -> vector<8x128xf32>
    %c0_3 = arith.constant 0 : index
    %c0_4 = arith.constant 0 : index
    %3 = vector.load %arg5[%c0_3, %c0_4] : memref<1x128xf32, #tpu.memory_space<vmem>>, vector<1x128xf32>
    %4 = vector.broadcast %3 : vector<1x128xf32> to vector<8x128xf32>
    %5 = arith.addf %2, %4 : vector<8x128xf32>
    %c0_5 = arith.constant 0 : index
    %c0_6 = arith.constant 0 : index
    %6 = vector.load %arg6[%c0_5, %c0_6] : memref<8x128xf32, #tpu.memory_space<vmem>>, vector<8x128xf32>
    tpu.vector_store %arg6[%c0_5, %c0_6], %5 {strides = array<i32>} : memref<8x128xf32, #tpu.memory_space<vmem>>, vector<8x128xf32>,
    return
  }
  func.func @transform_0(%arg0: i32, %arg1: i32, %arg2: i32) -> (i32, i32) {
    %c0_i32 = arith.constant 0 : i32
    return %arg0, %arg2 : i32, i32
  }
  func.func @transform_1(%arg0: i32, %arg1: i32, %arg2: i32) -> (i32, i32) {
    %c0_i32 = arith.constant 0 : i32
    return %arg2, %arg1 : i32, i32
  }
  func.func @transform_2(%arg0: i32, %arg1: i32, %arg2: i32) -> (i32, i32) {
    %c0_i32 = arith.constant 0 : i32
    %c0_i32_0 = arith.constant 0 : i32
    return %c0_i32, %arg1 : i32, i32
  }
  func.func @transform_3(%arg0: i32, %arg1: i32, %arg2: i32) -> (i32, i32) {
    %c0_i32 = arith.constant 0 : i32
    return %arg0, %arg1 : i32, i32
  }
}

</mosaic_0001>

<llo_original>
// kernel: tpu_custom_call.1
$region0: #{tpu_custom_call.1}
  #allocation0 [shape = 'u32[]', space=smem, size = 0x4, offset = 0x4, fixed_abs, tag = 'smem constant byte address 0x4 - core index']
  #allocation1 [shape = 'u32[144,128]{1,0:T(1,128)}', space=vmem, size = 0x12000, scoped, tag = 'internal scratch']
  %s0 = inlined_call_operand.hbm [shape: f32[2,32], index: 0, kind: input, shape index: {}]
  %s1 = inlined_call_operand.hbm [shape: f32[32,128], index: 1, kind: input, shape index: {}]
  %s2 = inlined_call_operand.vmem [shape: f32[1,128], index: 2, kind: input, shape index: {}]
  %s3 = inlined_call_operand.hbm [shape: f32[2,128], index: 3, kind: output, shape index: {}]
  %s4 = sld [smem:[#allocation0]]
  $region30: #{tpu_custom_call.1} parent=0
    _
  %s6 = ssub.s32 1, %s4
  %s7 = scalar_select 0, %s6, %s4
  $region1: #{tpu_custom_call.1} parent=0
    #allocation2 [shape = 'u8[4096]{0}', space=vmem, size = 0x1000, scoped, tag = 'input window, operand 0, single buffered']
    #allocation3 [shape = 's32[1]{0}', space=sflag, size = 0x4, scoped, tag = 'scoped memory for tpu_custom_call.1']
    #allocation4 [shape = 's32[1]{0}', space=sflag, size = 0x4, scoped, tag = 'scoped memory for tpu_custom_call.1']
    #allocation5 [shape = 'u8[16384]{0}', space=vmem, size = 0x4000, scoped, tag = 'input window, operand 1, single buffered']
    #allocation6 [shape = 's32[1]{0}', space=sflag, size = 0x4, scoped, tag = 'scoped memory for tpu_custom_call.1']
    #allocation7 [shape = 'u8[4096]{0}', space=vmem, size = 0x1000, scoped, tag = 'output window, operand 0, single buffered']
    %8 = vsyncpa [#allocation3], 0
    %9 = vsyncpa [#allocation6], 0
    %10 = vsyncpa [#allocation4], 0
    // Predicated region
    $region2: #{tpu_custom_call.1} parent=1 // pred_check
      _
    $region3: #{tpu_custom_call.1} parent=1 // pred_check_branch
      %12 = sbr.rel (0) target = $region5
    $region4: #{tpu_custom_call.1} parent=1 // pred_region
      %s14 = ssub.s32 128, 32
      %15 = vsyncadd [#allocation3], %s14
      %s16 = sshll.u32 [#allocation2], 4
      %s17 = int_to_ptr.vmem [resolvable:$true] %s16
      %22 = dma.hbm_to_vmem [thread:$0]  %s0, 32, %s17, [#allocation3], 32, 32, 2
    $region5: #{tpu_custom_call.1} parent=1 // pred_fallthru
      _
    // Predicated region
    $region6: #{tpu_custom_call.1} parent=1 // pred_check
      _
    $region7: #{tpu_custom_call.1} parent=1 // pred_check_branch
      %24 = sbr.rel (0) target = $region9
    $region8: #{tpu_custom_call.1} parent=1 // pred_region
      %s26 = ssub.s32 512, 512
      %27 = vsyncadd [#allocation6], %s26
      %s28 = sshll.u32 [#allocation5], 4
      %s29 = int_to_ptr.vmem [resolvable:$true] %s28
      %34 = dma.hbm_to_vmem [thread:$0]  %s1, 512, %s29, [#allocation6], 128, 128, 8
    $region9: #{tpu_custom_call.1} parent=1 // pred_fallthru
      _
    // Predicated region
    $region10: #{tpu_custom_call.1} parent=1 // pred_check
      _
    $region11: #{tpu_custom_call.1} parent=1 // pred_check_branch
      %36 = sbr.rel (0) target = $region13
    $region12: #{tpu_custom_call.1} parent=1 // pred_region
      _
    $region13: #{tpu_custom_call.1} parent=1 // pred_fallthru
      _
    // Predicated region
    $region14: #{tpu_custom_call.1} parent=1 // pred_check
      _
    $region15: #{tpu_custom_call.1} parent=1 // pred_check_branch
      %38 = sbr.rel (0) target = $region17
    $region16: #{tpu_custom_call.1} parent=1 // pred_region
      %39 = dma.done [#allocation3], 128
    $region17: #{tpu_custom_call.1} parent=1 // pred_fallthru
      _
    // Predicated region
    $region18: #{tpu_custom_call.1} parent=1 // pred_check
      _
    $region19: #{tpu_custom_call.1} parent=1 // pred_check_branch
      %41 = sbr.rel (0) target = $region21
    $region20: #{tpu_custom_call.1} parent=1 // pred_region
      %42 = dma.done [#allocation6], 512
    $region21: #{tpu_custom_call.1} parent=1 // pred_fallthru
      _
    %v43 = vld [vmem:[#allocation2] sm:$0xff]
    %v44 = vld [vmem:[#allocation5] sm:$0xff]
    %v45 = vld [vmem:[#allocation5 + $0x8] sm:$0xff]
    %v46 = vld [vmem:[#allocation5 + $0x10] sm:$0xff]
    %v47 = vld [vmem:[#allocation5 + $0x18] sm:$0xff]
    %v48 = vld [vmem:[%s2] sm:$0x1]
    %v50 = vlaneseq
    %v51 = vshrl.u32 %v50, 7
    %v52 = vsub.s32 0, %v51
    %v53 = vrot.slane %v48, %v52
    %vm55 = vcmask 261120
    %v57 = vsel %vm55, %v43, 0
    %59 = vmatprep.subr.mxu0 0.0
    %60 = vmatpush1.msra.mxu0 %v44
    %61 = vmatprep.subr.mxu0 0.0
    %62 = vmatpush1.msra.mxu0 %v45
    %63 = vmatprep.subr.mxu0 0.0
    %64 = vmatpush1.msra.mxu0 %v46
    %65 = vmatprep.subr.mxu0 0.0
    %66 = vmatpush1.msra.mxu0 %v47
    %67 = vmatprep.subr.mxu0 0.0
    %68 = vmatpush1.msra.mxu0 0.0
    %69 = vmatprep.subr.mxu0 0.0
    %70 = vmatpush1.msra.mxu0 0.0
    %71 = vmatprep.subr.mxu0 0.0
    %72 = vmatpush1.msra.mxu0 0.0
    %73 = vmatprep.subr.mxu0 0.0
    %74 = vmatpush1.msra.mxu0 0.0
    %75 = vmatprep.subr.mxu0 0.0
    %76 = vmatpush1.msra.mxu0 0.0
    %77 = vmatprep.subr.mxu0 0.0
    %78 = vmatpush1.msra.mxu0 0.0
    %79 = vmatprep.subr.mxu0 0.0
    %80 = vmatpush1.msra.mxu0 0.0
    %81 = vmatprep.subr.mxu0 0.0
    %82 = vmatpush1.msra.mxu0 0.0
    %83 = vmatprep.subr.mxu0 0.0
    %84 = vmatpush1.msra.mxu0 0.0
    %85 = vmatprep.subr.mxu0 0.0
    %86 = vmatpush1.msra.mxu0 0.0
    %87 = vmatprep.subr.mxu0 0.0
    %88 = vmatpush1.msra.mxu0 0.0
    %89 = vmatprep.subr.mxu0 0.0
    %90 = vmatpush1.msra.mxu0 0.0
    %91 = vmatprep.subr.mxu0 0.0
    %92 = vmatpush1.msra.mxu0 0.0
    %93 = vmatprep.subr.mxu0 0.0
    %94 = vmatpush1.msra.mxu0 0.0
    %95 = vmatprep.subr.mxu0 0.0
    %96 = vmatpush1.msra.mxu0 0.0
    %97 = vmatprep.subr.mxu0 0.0
    %98 = vmatpush1.msra.mxu0 0.0
    %99 = vmatprep.subr.mxu0 0.0
    %100 = vmatpush1.msra.mxu0 0.0
    %101 = vmatprep.subr.mxu0 0.0
    %102 = vmatpush1.msra.mxu0 0.0
    %103 = vmatprep.subr.mxu0 0.0
    %104 = vmatpush1.msra.mxu0 0.0
    %105 = vmatprep.subr.mxu0 0.0
    %106 = vmatpush1.msra.mxu0 0.0
    %107 = vmatprep.subr.mxu0 0.0
    %108 = vmatpush1.msra.mxu0 0.0
    %109 = vmatprep.subr.mxu0 0.0
    %110 = vmatpush1.msra.mxu0 0.0
    %111 = vmatprep.subr.mxu0 0.0
    %112 = vmatpush1.msra.mxu0 0.0
    %113 = vmatprep.subr.mxu0 0.0
    %114 = vmatpush1.msra.mxu0 0.0
    %115 = vmatprep.subr.mxu0 0.0
    %116 = vmatpush1.msra.mxu0 0.0
    %117 = vmatprep.subr.mxu0 0.0
    %118 = vmatpush1.msra.mxu0 0.0
    %119 = vmatprep.subr.mxu0 0.0
    %120 = vmatpush1.msra.mxu0 0.0
    %121 = vmatprep.subr.mxu0 0.0
    %122 = vmatpush1.msra.mxu0 0.0
    %123 = vmatprep.mubr.f32.mxu0 0.0
    %124 = vmatmul.mubr.f32.gmra.mrb[0].mxu0 %v57
    %v125 = vpop.f32.mrb[0].mxu0
    %v126 = vadd.f32 %v53, %v125
    %v127 = vpop.f32.mrb[0].mxu0
    %128 = vdwg.mxu0
    %129 = vst [vmem:[#allocation7] sm:$0xff] %v126
    // Predicated region
    $region22: #{tpu_custom_call.1} parent=1 // pred_check
      _
    $region23: #{tpu_custom_call.1} parent=1 // pred_check_branch
      %131 = sbr.rel (0) target = $region25
    $region24: #{tpu_custom_call.1} parent=1 // pred_region
      %s133 = ssub.s32 128, 32
      %134 = vsyncadd [#allocation4], %s133
      %s135 = sshll.u32 [#allocation7], 4
      %s136 = int_to_ptr.vmem [resolvable:$true] %s135
      %141 = dma.vmem_to_hbm [thread:$0]  %s136, 32, %s3, [#allocation4], 32, 32, 2
    $region25: #{tpu_custom_call.1} parent=1 // pred_fallthru
      _
    // Predicated region
    $region26: #{tpu_custom_call.1} parent=1 // pred_check
      _
    $region27: #{tpu_custom_call.1} parent=1 // pred_check_branch
      %143 = sbr.rel (0) target = $region29
    $region28: #{tpu_custom_call.1} parent=1 // pred_region
      %144 = dma.done [#allocation4], 128
    $region29: #{tpu_custom_call.1} parent=1 // pred_fallthru
      _
    %145 = vsyncpa [#allocation3], 1
    %146 = vsyncpa [#allocation6], 1
    %147 = vsyncpa [#allocation4], 1

</llo_original>
